<compile_context>
chip_gen: v7x
topology: tpu7x:2x2x1
jax: 0.10.0
libtpu: 0.0.40
codegen_flags: <defaults>
</compile_context>

<pallas_src>
import functools

import jax
import jax.numpy as jnp
from jax import lax
from jax.experimental import pallas as pl
from jax.experimental.pallas import tpu as pltpu

_EPS = 1e-6  # F.pairwise_distance default eps (added to the elementwise difference)
_LANES = 128


def _contrastive_loss_kernel(x1_ref, x2_ref, label_ref, out_ref, *,
                             margin, batch, block_rows, sub_in_bf16):
    i = pl.program_id(0)

    if sub_in_bf16:
        # bf16 subtract (halves cast+sub VALU work), upcast the diff for the
        # eps-add / square / lane-reduce.  Only selected for bf16 inputs.
        diff = (x1_ref[...] - x2_ref[...]).astype(jnp.float32) + _EPS
    else:
        diff = x1_ref[...].astype(jnp.float32) - x2_ref[...].astype(jnp.float32) + _EPS

    dist_sq = jnp.sum(diff * diff, axis=-1, keepdims=True)        # (TB, 1) f32
    dist = jnp.sqrt(dist_sq)                                       # only for the margin term

    lab = label_ref[...]                                           # (TB, 1) f32

    same_term = (1.0 - lab) * dist_sq
    diff_term = lab * jnp.square(jnp.maximum(jnp.float32(margin) - dist, 0.0))
    per_row = same_term + diff_term                                # (TB, 1)

    # Mask padded rows of the (possibly ragged) last batch tile.
    row = i * block_rows + lax.broadcasted_iota(jnp.int32, per_row.shape, 0)
    per_row = jnp.where(row < batch, per_row, 0.0)

    # Lane-dense partial-sum output block: one unmasked (1, 128) store per step.
    tile_sum = jnp.sum(per_row)
    out_ref[...] = jnp.full((1, _LANES), tile_sum, dtype=jnp.float32)


def _pick_block_rows(batch, dim, itemsize, requested=None):
    """Rows per tile.

    Sized from the total double-buffered VMEM footprint:
      per row: 2 embedding inputs (dim * itemsize each) + the label block,
      which is lane-padded to 128 f32 lanes (512 B) in VMEM,
      all times 2 pipeline buffers.
    Rounded to the dtype's packed-sublane multiple and clamped to the padded
    batch size.
    """
    if itemsize >= 4:
        sub = 8          # f32
    elif itemsize == 2:
        sub = 16         # bf16 packs 2 rows / sublane
    else:
        sub = 32         # int8 / fp8
    b_pad = -(-batch // sub) * sub

    if requested is not None:
        tb = int(requested)
    else:
        vmem_budget = 32 * 1024 * 1024              # total double-buffered footprint
        per_row = 2 * (2 * dim * itemsize + _LANES * 4)
        tb = vmem_budget // max(1, per_row)

    tb = max(sub, (tb // sub) * sub)
    return min(tb, b_pad)


def contrastive_loss(output1, output2, label, margin=1.0, block_rows=None):
    """Pallas TPU implementation of ContrastiveLoss.forward.

    Args:
      output1: (B, D) float embeddings (f32 or bf16).
      output2: (B, D) float embeddings (f32 or bf16).
      label:   (B,)   binary labels (0 = different, 1 = same).
      margin:  float margin (default 1.0, matches the PyTorch module).
      block_rows: optional batch-tile size override.

    Returns:
      scalar float32 loss.
    """
    B, D = output1.shape
    label2d = label.reshape(B, 1).astype(jnp.float32)

    itemsize = jnp.dtype(output1.dtype).itemsize
    tb = _pick_block_rows(B, D, itemsize, block_rows)
    num_tiles = pl.cdiv(B, tb)

    sub_in_bf16 = (output1.dtype == jnp.bfloat16 and output2.dtype == jnp.bfloat16)

    kernel = functools.partial(
        _contrastive_loss_kernel,
        margin=float(margin), batch=B, block_rows=tb, sub_in_bf16=sub_in_bf16,
    )

    partials = pl.pallas_call(
        kernel,
        out_shape=jax.ShapeDtypeStruct((1, _LANES * num_tiles), jnp.float32),
        grid=(num_tiles,),
        in_specs=[
            pl.BlockSpec((tb, D), lambda i: (i, 0)),
            pl.BlockSpec((tb, D), lambda i: (i, 0)),
            pl.BlockSpec((tb, 1), lambda i: (i, 0)),
        ],
        out_specs=pl.BlockSpec((1, _LANES), lambda i: (0, i)),
        compiler_params=pltpu.CompilerParams(
            # Independent per-tile partial sums -> grid axis is parallel, so the
            # HBM-bound loop can shard across both v7x TensorCores.
            dimension_semantics=("parallel",),
            # 32 MiB footprint target needs more than v5e's 16 MiB scoped
            # default; 48 MiB stays under v7x's 64 MiB physical VMEM.
            vmem_limit_bytes=48 * 1024 * 1024,
        ),
    )(output1, output2, label2d)

    per_tile = partials.reshape(num_tiles, _LANES)[:, 0]   # each lane holds the same partial
    return jnp.sum(per_tile) / jnp.float32(B)


def _reference_loss(output1, output2, label, margin=1.0):
    # Pure-JAX reference mirroring the PyTorch code, for a sanity check.
    diff = output1.astype(jnp.float32) - output2.astype(jnp.float32) + _EPS
    d = jnp.sqrt(jnp.sum(diff * diff, axis=-1))
    return jnp.mean((1.0 - label.astype(jnp.float32)) * d * d
                    + label.astype(jnp.float32)
                    * jnp.square(jnp.maximum(margin - d, 0.0)))


if __name__ == "__main__":
    key = jax.random.PRNGKey(0)
    k1, k2, k3, k4, k5, k6 = jax.random.split(key, 6)

    # Case 1: f32, ragged batch, small block_rows to exercise multi-tile
    # parallel partial sums + last-tile masking.
    B1, D1 = 37, 64
    a1 = jax.random.normal(k1, (B1, D1), dtype=jnp.float32)
    b1 = jax.random.normal(k2, (B1, D1), dtype=jnp.float32)
    l1 = jax.random.bernoulli(k3, 0.5, (B1,)).astype(jnp.float32)
    loss1 = jax.block_until_ready(contrastive_loss(a1, b1, l1, margin=1.0, block_rows=16))
    ref1 = _reference_loss(a1, b1, l1, margin=1.0)
    assert jnp.allclose(loss1, ref1, rtol=1e-5, atol=1e-5), (loss1, ref1)

    # Case 2: bf16 inputs, default tile sizing (exercises the bf16-subtract path).
    B2, D2 = 48, 64
    a2 = jax.random.normal(k4, (B2, D2), dtype=jnp.bfloat16)
    b2 = jax.random.normal(k5, (B2, D2), dtype=jnp.bfloat16)
    l2 = jax.random.bernoulli(k6, 0.5, (B2,)).astype(jnp.float32)
    loss2 = jax.block_until_ready(contrastive_loss(a2, b2, l2, margin=1.0))
    ref2 = _reference_loss(a2, b2, l2, margin=1.0)
    assert jnp.allclose(loss2, ref2, rtol=2e-2, atol=2e-2), (loss2, ref2)

    print("KERNEL_OK")
</pallas_src>

<mosaic_0001>
module attributes {stable_mosaic.version = 11 : i64} {
  func.func @_contrastive_loss_kernel(%arg0: i32, %arg1: memref<16x64xf32, #tpu.memory_space<vmem>>, %arg2: memref<16x64xf32, #tpu.memory_space<vmem>>, %arg3: memref<16x1xf32, #tpu.memory_space<vmem>>, %arg4: memref<1x128xf32, #tpu.memory_space<vmem>>) attributes {dimension_semantics = [#tpu.dimension_semantics<parallel>], iteration_bounds = array<i64: 3>, scalar_prefetch = 0 : i64, scratch_operands = 0 : i64, tpu.core_type = #tpu.core_type<tc>, window_params = [{transform_indices = @transform_0, window_bounds = array<i64: 16, 64>}, {transform_indices = @transform_1, window_bounds = array<i64: 16, 64>}, {transform_indices = @transform_2, window_bounds = array<i64: 16, 1>}, {transform_indices = @transform_3, window_bounds = array<i64: 1, 128>}]} {
    %c0 = arith.constant 0 : index
    %c0_0 = arith.constant 0 : index
    %0 = vector.load %arg1[%c0, %c0_0] : memref<16x64xf32, #tpu.memory_space<vmem>>, vector<16x64xf32>
    %c0_1 = arith.constant 0 : index
    %c0_2 = arith.constant 0 : index
    %1 = vector.load %arg2[%c0_1, %c0_2] : memref<16x64xf32, #tpu.memory_space<vmem>>, vector<16x64xf32>
    %2 = arith.subf %0, %1 : vector<16x64xf32>
    %cst = arith.constant 9.99999997E-7 : f32
    %3 = vector.broadcast %cst : f32 to vector<16x64xf32>
    %4 = arith.addf %2, %3 : vector<16x64xf32>
    %5 = arith.mulf %4, %4 : vector<16x64xf32>
    %cst_3 = arith.constant dense<0.000000e+00> : vector<16xf32>
    %6 = vector.multi_reduction <add>, %5, %cst_3 [1] : vector<16x64xf32> to vector<16xf32>
    %7 = vector.shape_cast %6 : vector<16xf32> to vector<16x1xf32>
    %8 = math.sqrt %7 : vector<16x1xf32>
    %c0_4 = arith.constant 0 : index
    %c0_5 = arith.constant 0 : index
    %9 = vector.load %arg3[%c0_4, %c0_5] : memref<16x1xf32, #tpu.memory_space<vmem>>, vector<16x1xf32>
    %cst_6 = arith.constant 1.000000e+00 : f32
    %10 = vector.broadcast %cst_6 : f32 to vector<16x1xf32>
    %11 = arith.subf %10, %9 : vector<16x1xf32>
    %12 = arith.mulf %11, %7 : vector<16x1xf32>
    %cst_7 = arith.constant 1.000000e+00 : f32
    %13 = vector.broadcast %cst_7 : f32 to vector<16x1xf32>
    %14 = arith.subf %13, %8 : vector<16x1xf32>
    %cst_8 = arith.constant 0.000000e+00 : f32
    %15 = vector.broadcast %cst_8 : f32 to vector<16x1xf32>
    %16 = arith.maximumf %14, %15 : vector<16x1xf32>
    %17 = arith.mulf %16, %16 : vector<16x1xf32>
    %18 = arith.mulf %9, %17 : vector<16x1xf32>
    %19 = arith.addf %12, %18 : vector<16x1xf32>
    %c16_i32 = arith.constant 16 : i32
    %20 = arith.muli %arg0, %c16_i32 : i32
    %21 = tpu.iota {dimensions = array<i32: 0>} : vector<16x1xi32>
    %22 = vector.broadcast %20 : i32 to vector<16x1xi32>
    %23 = arith.addi %22, %21 : vector<16x1xi32>
    %c37_i32 = arith.constant 37 : i32
    %24 = vector.broadcast %c37_i32 : i32 to vector<16x1xi32>
    %25 = arith.cmpi slt, %23, %24 : vector<16x1xi32>
    %cst_9 = arith.constant 0.000000e+00 : f32
    %26 = vector.broadcast %cst_9 : f32 to vector<16x1xf32>
    %27 = arith.select %25, %19, %26 : vector<16x1xi1>, vector<16x1xf32>
    %28 = vector.shape_cast %27 : vector<16x1xf32> to vector<1x16x1xf32>
    %cst_10 = arith.constant dense<0.000000e+00> : vector<1xf32>
    %29 = vector.multi_reduction <add>, %28, %cst_10 [1, 2] : vector<1x16x1xf32> to vector<1xf32>
    %30 = vector.shape_cast %29 : vector<1xf32> to vector<1x1x1xf32>
    %31 = vector.extract %30[0, 0, 0] : f32 from vector<1x1x1xf32>
    %32 = vector.broadcast %31 : f32 to vector<1x128xf32>
    %c0_11 = arith.constant 0 : index
    %c0_12 = arith.constant 0 : index
    %33 = vector.load %arg4[%c0_11, %c0_12] : memref<1x128xf32, #tpu.memory_space<vmem>>, vector<1x128xf32>
    tpu.vector_store %arg4[%c0_11, %c0_12], %32 {strides = array<i32>} : memref<1x128xf32, #tpu.memory_space<vmem>>, vector<1x128xf32>,
    return
  }
  func.func @transform_0(%arg0: i32) -> (i32, i32) {
    %c0_i32 = arith.constant 0 : i32
    %c0_i32_0 = arith.constant 0 : i32
    return %arg0, %c0_i32 : i32, i32
  }
  func.func @transform_1(%arg0: i32) -> (i32, i32) {
    %c0_i32 = arith.constant 0 : i32
    %c0_i32_0 = arith.constant 0 : i32
    return %arg0, %c0_i32 : i32, i32
  }
  func.func @transform_2(%arg0: i32) -> (i32, i32) {
    %c0_i32 = arith.constant 0 : i32
    %c0_i32_0 = arith.constant 0 : i32
    return %arg0, %c0_i32 : i32, i32
  }
  func.func @transform_3(%arg0: i32) -> (i32, i32) {
    %c0_i32 = arith.constant 0 : i32
    %c0_i32_0 = arith.constant 0 : i32
    return %c0_i32, %arg0 : i32, i32
  }
}

</mosaic_0001>

<llo_original>
// kernel: tpu_custom_call.1
$region0: #{tpu_custom_call.1}
  #allocation0 [shape = 'u32[]', space=smem, size = 0x4, offset = 0x4, fixed_abs, tag = 'smem constant byte address 0x4 - core index']
  #allocation1 [shape = 'u32[144,128]{1,0:T(1,128)}', space=vmem, size = 0x12000, scoped, tag = 'internal scratch']
  %s0 = inlined_call_operand.vmem [shape: f32[37,64], index: 0, kind: input, shape index: {}]
  %s1 = inlined_call_operand.hbm [shape: f32[37,64], index: 1, kind: input, shape index: {}]
  %s2 = inlined_call_operand.vmem [shape: f32[37,1], index: 2, kind: input, shape index: {}]
  %s3 = inlined_call_operand.hbm [shape: f32[1,384], index: 3, kind: output, shape index: {}]
  %s4 = sld [smem:[#allocation0]]
  $region49: #{tpu_custom_call.1} parent=0
    _
  %s6 = ssub.s32 1, %s4
  %s7 = scalar_select 0, %s6, %s4
  $region1: #{tpu_custom_call.1} parent=0
    #allocation2 [shape = 'u8[16384]{0}', space=vmem, size = 0x4000, scoped, tag = 'input window, operand 1']
    #allocation3 [shape = 's32[2]{0}', space=sflag, size = 0x8, scoped, tag = 'scoped memory for tpu_custom_call.1']
    #allocation4 [shape = 's32[2]{0}', space=sflag, size = 0x8, scoped, tag = 'scoped memory for tpu_custom_call.1']
    #allocation5 [shape = 'u8[1024]{0}', space=vmem, size = 0x400, scoped, tag = 'output window, operand 0']
    %8 = vsyncpa [#allocation3], 0
    %s9 = scalar_lea.sflag [#allocation3], 1
    %10 = vsyncpa %s9, 0
    %11 = vsyncpa [#allocation4], 0
    %s12 = scalar_lea.sflag [#allocation4], 1
    %13 = vsyncpa %s12, 0
    loop: start=0, step=1, limit=5
    $region2: #{tpu_custom_call.1} parent=1 // loop_pre_header
      _
    $region3: #{tpu_custom_call.1} parent=1 // loop_header
      %s15 = sphi 0, %s19
      %p16 = scmp.ge.s32.totalorder %s15, 5
      %s25 = sphi 0, %s27
      %s28 = sphi 0, %s25
      %s29 = sphi 0, %s28
      %s45 = sphi 0, %s29
      %s51 = sphi 0, %s53
      %s54 = sphi 0, %s51
      %s55 = sphi 0, %s54
      %s71 = sphi 0, %s55
      %s77 = sphi 0, %s79
      %s80 = sphi 0, %s77
      %s81 = sphi 0, %s80
      %s97 = sphi 0, %s81
      %s103 = sphi 0, %s105
      %s106 = sphi 0, %s103
      %s107 = sphi 0, %s106
      %s123 = sphi 0, %s107
    $region4: #{tpu_custom_call.1} parent=1 // loop_header_branch
      %18 = sbr.rel (%p16) target = $region8
    $region5: #{tpu_custom_call.1} parent=1 // loop_body
      %s20 = ssub.s32 %s15, 1
      %s21 = ssub.s32 %s15, 2
      %s22 = sadd.s32 %s15, 1
      %s23 = ssub.s32 %s15, %s22
      %p24 = scmp.eq.s32.totalorder %s23, 0
      %s26 = sadd.s32 %s25, 1
      %s27 = scalar_select %p24, %s25, %s26
      %p30 = pneg %p24
      %p31 = scmp.eq.s32.totalorder %s15, 2
      %p32 = por %p30, %p31
      %p33 = scmp.ne.s32.totalorder %s25, %s28
      %p34 = scmp.eq.s32.totalorder %s15, 0
      %p35 = por %p33, %p34
      %p36 = scmp.ne.s32.totalorder %s25, %s28
      %p37 = scmp.eq.s32.totalorder %s20, 2
      %p38 = por %p36, %p37
      %p39 = scmp.ne.s32.totalorder %s28, %s29
      %p40 = scmp.eq.s32.totalorder %s20, 0
      %p41 = por %p39, %p40
      %p42 = scmp.ne.s32.totalorder %s28, %s29
      %p43 = scmp.eq.s32.totalorder %s21, 2
      %p44 = por %p42, %p43
      %p46 = scmp.ne.s32.totalorder %s29, %s45
      %p47 = scmp.eq.s32.totalorder %s21, 0
      %p48 = por %p46, %p47
      %s49 = ssub.s32 %s15, %s22
      %p50 = scmp.eq.s32.totalorder %s49, 0
      %s52 = sadd.s32 %s51, 1
      %s53 = scalar_select %p50, %s51, %s52
      %p56 = pneg %p50
      %p57 = scmp.eq.s32.totalorder %s15, 2
      %p58 = por %p56, %p57
      %p59 = scmp.ne.s32.totalorder %s51, %s54
      %p60 = scmp.eq.s32.totalorder %s15, 0
      %p61 = por %p59, %p60
      %p62 = scmp.ne.s32.totalorder %s51, %s54
      %p63 = scmp.eq.s32.totalorder %s20, 2
      %p64 = por %p62, %p63
      %p65 = scmp.ne.s32.totalorder %s54, %s55
      %p66 = scmp.eq.s32.totalorder %s20, 0
      %p67 = por %p65, %p66
      %p68 = scmp.ne.s32.totalorder %s54, %s55
      %p69 = scmp.eq.s32.totalorder %s21, 2
      %p70 = por %p68, %p69
      %p72 = scmp.ne.s32.totalorder %s55, %s71
      %p73 = scmp.eq.s32.totalorder %s21, 0
      %p74 = por %p72, %p73
      %s75 = ssub.s32 %s15, %s22
      %p76 = scmp.eq.s32.totalorder %s75, 0
      %s78 = sadd.s32 %s77, 1
      %s79 = scalar_select %p76, %s77, %s78
      %p82 = pneg %p76
      %p83 = scmp.eq.s32.totalorder %s15, 2
      %p84 = por %p82, %p83
      %p85 = scmp.ne.s32.totalorder %s77, %s80
      %p86 = scmp.eq.s32.totalorder %s15, 0
      %p87 = por %p85, %p86
      %p88 = scmp.ne.s32.totalorder %s77, %s80
      %p89 = scmp.eq.s32.totalorder %s20, 2
      %p90 = por %p88, %p89
      %p91 = scmp.ne.s32.totalorder %s80, %s81
      %p92 = scmp.eq.s32.totalorder %s20, 0
      %p93 = por %p91, %p92
      %p94 = scmp.ne.s32.totalorder %s80, %s81
      %p95 = scmp.eq.s32.totalorder %s21, 2
      %p96 = por %p94, %p95
      %p98 = scmp.ne.s32.totalorder %s81, %s97
      %p99 = scmp.eq.s32.totalorder %s21, 0
      %p100 = por %p98, %p99
      %s101 = ssub.s32 %s15, %s22
      %p102 = scmp.eq.s32.totalorder %s101, 0
      %s104 = sadd.s32 %s103, 1
      %s105 = scalar_select %p102, %s103, %s104
      %p108 = pneg %p102
      %p109 = scmp.eq.s32.totalorder %s15, 2
      %p110 = por %p108, %p109
      %p111 = scmp.ne.s32.totalorder %s103, %s106
      %p112 = scmp.eq.s32.totalorder %s15, 0
      %p113 = por %p111, %p112
      %p114 = scmp.ne.s32.totalorder %s103, %s106
      %p115 = scmp.eq.s32.totalorder %s20, 2
      %p116 = por %p114, %p115
      %p117 = scmp.ne.s32.totalorder %s106, %s107
      %p118 = scmp.eq.s32.totalorder %s20, 0
      %p119 = por %p117, %p118
      %p120 = scmp.ne.s32.totalorder %s106, %s107
      %p121 = scmp.eq.s32.totalorder %s21, 2
      %p122 = por %p120, %p121
      %p124 = scmp.ne.s32.totalorder %s107, %s123
      %p125 = scmp.eq.s32.totalorder %s21, 0
      %p126 = por %p124, %p125
      %p127 = scmp.le.s32.totalorder 1, %s15
      %p128 = scmp.lt.s32.totalorder %s15, 4
      %p129 = pnand %p127, %p128
      %p130 = pneg %p129
      // Predicated region
      $region9: #{tpu_custom_call.1} parent=5 // pred_check
        _
      $region10: #{tpu_custom_call.1} parent=5 // pred_check_branch
        %132 = sbr.rel (%p129) target = $region12
      $region11: #{tpu_custom_call.1} parent=5 // pred_region
        %s133 = ssub.s32 %s15, 1
      $region12: #{tpu_custom_call.1} parent=5 // pred_fallthru
        _
      %p134 = scmp.lt.s32.totalorder %s15, 3
      // Predicated region
      $region13: #{tpu_custom_call.1} parent=5 // pred_check
        %p135 = pneg %p134
      $region14: #{tpu_custom_call.1} parent=5 // pred_check_branch
        %137 = sbr.rel (%p135) target = $region16
      $region15: #{tpu_custom_call.1} parent=5 // pred_region
        // Predicated region
        $region17: #{tpu_custom_call.1} parent=15 // pred_check
          %p138 = pneg %p35
        $region18: #{tpu_custom_call.1} parent=15 // pred_check_branch
          %140 = sbr.rel (%p138) target = $region20
        $region19: #{tpu_custom_call.1} parent=15 // pred_region
          %s141 = smul.u32 2, %s15
          %s142 = ssub.s32 5, %s141
          %p143 = scmp.lt.s32.totalorder %s142, 2
          %s144 = scalar_select %p143, %s142, 2
          %s145 = smul.u32 128, %s144
          %p146 = scmp.lt.s32.totalorder %s141, 4
          %s147 = scalar_select %p146, %s141, 4
          %s148 = smul.addr %s147, 8
          %s149 = scalar_lea.vmem %s0, %s148
          %s150 = smul.u32 2, %s15
          %s151 = ssub.s32 5, %s150
          %p152 = scmp.lt.s32.totalorder %s151, 2
          %s153 = scalar_select %p152, %s151, 2
          %s154 = smul.u32 128, %s153
        $region20: #{tpu_custom_call.1} parent=15 // pred_fallthru
          _
        // Predicated region
        $region21: #{tpu_custom_call.1} parent=15 // pred_check
          %p155 = pneg %p61
        $region22: #{tpu_custom_call.1} parent=15 // pred_check_branch
          %157 = sbr.rel (%p155) target = $region24
        $region23: #{tpu_custom_call.1} parent=15 // pred_region
          %s158 = sand.u32 %s51, 1
          %s159 = scalar_lea.sflag [#allocation3], %s158
          %s160 = sand.u32 %s51, 1
          %s161 = smul.addr %s160, 16
          %s162 = scalar_lea.vmem [#allocation2], %s161
          %s163 = smul.u32 2, %s15
          %s164 = ssub.s32 5, %s163
          %p165 = scmp.lt.s32.totalorder %s164, 2
          %s166 = scalar_select %p165, %s164, 2
          %s167 = smul.u32 128, %s166
          %s169 = ssub.s32 256, %s167
          %170 = vsyncadd %s159, %s169
          %p171 = scmp.ne.s32.totalorder 0, %s167
          %s172 = smul.addr %s163, 128
          %s173 = scalar_lea.hbm %s1, %s172
          %s174 = smul.u32 8, %s166
          %s175 = sshll.u32 %s162, 4
          %s176 = int_to_ptr.vmem [resolvable:$true] %s175
          %s177 = sshll.u32 %s174, 4
          %181 = dma.hbm_to_vmem [thread:$0]  (%p171), %s173, %s177, %s176, %s159, 128, 128, 8
        $region24: #{tpu_custom_call.1} parent=15 // pred_fallthru
          _
        // Predicated region
        $region25: #{tpu_custom_call.1} parent=15 // pred_check
          %p182 = pneg %p87
        $region26: #{tpu_custom_call.1} parent=15 // pred_check_branch
          %184 = sbr.rel (%p182) target = $region28
        $region27: #{tpu_custom_call.1} parent=15 // pred_region
          %s185 = smul.u32 2, %s15
          %s186 = ssub.s32 5, %s185
          %p187 = scmp.lt.s32.totalorder %s186, 2
          %s188 = scalar_select %p187, %s186, 2
          %s189 = smul.u32 128, %s188
          %p190 = scmp.lt.s32.totalorder %s185, 4
          %s191 = scalar_select %p190, %s185, 4
          %s192 = smul.addr %s191, 8
          %s193 = scalar_lea.vmem %s2, %s192
          %s194 = smul.u32 2, %s15
          %s195 = ssub.s32 5, %s194
          %p196 = scmp.lt.s32.totalorder %s195, 2
          %s197 = scalar_select %p196, %s195, 2
          %s198 = smul.u32 128, %s197
        $region28: #{tpu_custom_call.1} parent=15 // pred_fallthru
          _
      $region16: #{tpu_custom_call.1} parent=5 // pred_fallthru
        _
      %p199 = scmp.le.s32.totalorder 1, %s15
      %p200 = scmp.lt.s32.totalorder %s15, 4
      %p201 = pnand %p199, %p200
      %p202 = pneg %p201
      // Predicated region
      $region29: #{tpu_custom_call.1} parent=5 // pred_check
        _
      $region30: #{tpu_custom_call.1} parent=5 // pred_check_branch
        %204 = sbr.rel (%p201) target = $region32
      $region31: #{tpu_custom_call.1} parent=5 // pred_region
        %s205 = ssub.s32 %s15, 1
        %s206 = sand.u32 %s54, 1
        %s207 = scalar_lea.sflag [#allocation3], %s206
        %s208 = sand.u32 %s54, 1
        %s209 = smul.addr %s208, 16
        %s210 = scalar_lea.vmem [#allocation2], %s209
        // Predicated region
        $region33: #{tpu_custom_call.1} parent=31 // pred_check
          %p211 = pneg %p67
        $region34: #{tpu_custom_call.1} parent=31 // pred_check_branch
          %213 = sbr.rel (%p211) target = $region36
        $region35: #{tpu_custom_call.1} parent=31 // pred_region
          %214 = dma.done %s207, 256
        $region36: #{tpu_custom_call.1} parent=31 // pred_fallthru
          _
        %s215 = smul.u32 2, %s20
        %s216 = ssub.s32 5, %s215
        %p217 = scmp.lt.s32.totalorder %s216, 2
        %s218 = scalar_select %p217, %s216, 2
        %s219 = smul.u32 128, %s218
        %p220 = scmp.lt.s32.totalorder %s215, 4
        %s221 = scalar_select %p220, %s215, 4
        %s222 = smul.addr %s221, 8
        %s223 = scalar_lea.vmem %s0, %s222
        %p224 = pneg %p41
        %p225 = pneg %p38
        %s226 = sand.u32 %s54, 1
        %s227 = scalar_lea.sflag [#allocation3], %s226
        %s228 = sand.u32 %s54, 1
        %s229 = smul.addr %s228, 16
        %s230 = scalar_lea.vmem [#allocation2], %s229
        %p231 = pneg %p67
        %p232 = pneg %p64
        %s233 = smul.u32 2, %s20
        %s234 = ssub.s32 5, %s233
        %p235 = scmp.lt.s32.totalorder %s234, 2
        %s236 = scalar_select %p235, %s234, 2
        %s237 = smul.u32 128, %s236
        %p238 = scmp.lt.s32.totalorder %s233, 4
        %s239 = scalar_select %p238, %s233, 4
        %s240 = smul.addr %s239, 8
        %s241 = scalar_lea.vmem %s2, %s240
        %p242 = pneg %p93
        %p243 = pneg %p90
        %p244 = pneg %p119
        %p245 = pneg %p116
        %s246 = sand.u32 %s106, 1
        %s247 = scalar_lea.sflag [#allocation4], %s246
        %s248 = sand.u32 %s106, 1
        %s249 = scalar_lea.vmem [#allocation5], %s248
        %s250 = smul.u32 2, %s20
        %s251 = ssub.s32 5, %s250
        %p252 = scmp.lt.s32.totalorder %s251, 2
        %s253 = scalar_select %p252, %s251, 2
        %s254 = smul.u32 128, %s253
        %p255 = scmp.lt.s32.totalorder %s250, 4
        %s256 = scalar_select %p255, %s250, 4
        %s257 = smul.addr %s256, 8
        %s258 = scalar_lea.vmem %s0, %s257
        %s259 = smul.u32 2, %s20
        %s260 = ssub.s32 5, %s259
        %p261 = scmp.lt.s32.totalorder %s260, 2
        %s262 = scalar_select %p261, %s260, 2
        %s263 = smul.u32 128, %s262
        %s264 = smul.u32 2, %s20
        %s265 = ssub.s32 5, %s264
        %p266 = scmp.lt.s32.totalorder %s265, 2
        %s267 = scalar_select %p266, %s265, 2
        %s268 = smul.u32 128, %s267
        %s269 = smul.u32 2, %s20
        %s270 = ssub.s32 5, %s269
        %p271 = scmp.lt.s32.totalorder %s270, 2
        %s272 = scalar_select %p271, %s270, 2
        %s273 = smul.u32 128, %s272
        %p274 = scmp.lt.s32.totalorder %s269, 4
        %s275 = scalar_select %p274, %s269, 4
        %s276 = smul.addr %s275, 8
        %s277 = scalar_lea.vmem %s2, %s276
        %s278 = smul.u32 2, %s20
        %s279 = ssub.s32 5, %s278
        %p280 = scmp.lt.s32.totalorder %s279, 2
        %s281 = scalar_select %p280, %s279, 2
        %s282 = smul.u32 128, %s281
        %v283 = vld [vmem:[%s258] sm:$0xff]
        %v284 = vld [vmem:[%s258 + $0x8] sm:$0xff]
        %v285 = vld [vmem:[%s210] sm:$0xff]
        %v286 = vld [vmem:[%s210 + $0x8] sm:$0xff]
        %v287 = vsub.f32 %v283, %v285
        %v288 = vsub.f32 %v284, %v286
        %v289 = vadd.f32 %v287, 1e-06
        %v290 = vadd.f32 %v288, 1e-06
        %v291 = vmul.f32 %v289, %v289
        %v292 = vmul.f32 %v290, %v290
        %vm293 = vcmask 523264
        %v294 = vsel %vm293, %v291, 0.0
        %295 = vadd.xlane.f32.xlu0 %v294
        %v296 = vpop.xlane.xlu0 %295
        %v297 = vsel %vm293, %v292, 0.0
        %298 = vadd.xlane.f32.xlu0 %v297
        %v299 = vpop.xlane.xlu0 %298
        %v300 = vrsqrt.pop %v296
        %v301 = vmul.f32 %v296, %v300
        %vm302 = vcmp.eq.f32.partialorder %v296, inf
        %v303 = vsel %vm302, %v296, %v301
        %vm304 = vcmp.eq.f32.partialorder %v296, 0.0
        %v305 = vand.u32 %v296, 2147483648
        %v306 = vsel %vm304, %v305, %v303
        %v307 = vrsqrt.pop %v299
        %v308 = vmul.f32 %v299, %v307
        %vm309 = vcmp.eq.f32.partialorder %v299, inf
        %v310 = vsel %vm309, %v299, %v308
        %vm311 = vcmp.eq.f32.partialorder %v299, 0.0
        %v312 = vand.u32 %v299, 2147483648
        %v313 = vsel %vm311, %v312, %v310
        %v314 = vld [vmem:[%s277] sm:$0xff]
        %v315 = vld [vmem:[%s277 + $0x8] sm:$0xff]
        %v316 = vsub.f32 1.0, %v314
        %v317 = vsub.f32 1.0, %v315
        %v318 = vmul.f32 %v316, %v296
        %v319 = vmul.f32 %v317, %v299
        %v320 = vsub.f32 1.0, %v306
        %v321 = vsub.f32 1.0, %v313
        %v322 = vmax.f32 %v320, 0.0
        %v323 = vmax.f32 %v321, 0.0
        %v324 = vmul.f32 %v322, %v322
        %v325 = vmul.f32 %v323, %v323
        %v326 = vmul.f32 %v314, %v324
        %v327 = vmul.f32 %v315, %v325
        %v328 = vadd.f32 %v318, %v326
        %v329 = vadd.f32 %v319, %v327
        %s330 = smul.u32 %s20, 16
        %v331 = vlaneseq
        %v332 = vshrl.u32 %v331, 7
        %v333 = vadd.s32 %v332, 8
        %v334 = vstv %s330
        %v335 = vadd.s32 %v334, %v332
        %v336 = vadd.s32 %v334, %v333
        %vm337 = vcmp.lt.s32.totalorder %v335, 37
        %vm338 = vcmp.lt.s32.totalorder %v336, 37
        %v339 = vsel %vm337, %v328, 0.0
        %v340 = vsel %vm338, %v329, 0.0
        %vm341 = vcmask 7168
        %v342 = vsel %vm341, %v339, 0.0
        %v343 = vsel %vm341, %v340, 0.0
        %v344 = vadd.f32 %v342, %v343
        %345 = vadd.xlane.f32.xlu0 %v344
        %v346 = vpop.xlane.xlu0 %345
        %v347 = vrot.slane %v346, 4
        %v348 = vadd.f32 %v346, %v347
        %v349 = vrot.slane %v348, 2
        %v350 = vadd.f32 %v348, %v349
        %v351 = vrot.slane %v350, 1
        %v352 = vadd.f32 %v350, %v351
        %s353 = vtos %v352
        %v354 = vstv %s353
        %355 = vst [vmem:[%s249] sm:$0x1] %v354
        %s356 = sand.u32 %s106, 1
        %s357 = scalar_lea.sflag [#allocation4], %s356
        %s358 = sand.u32 %s106, 1
        %s359 = scalar_lea.vmem [#allocation5], %s358
        // Predicated region
        $region37: #{tpu_custom_call.1} parent=31 // pred_check
          %p360 = pneg %p116
        $region38: #{tpu_custom_call.1} parent=31 // pred_check_branch
          %362 = sbr.rel (%p360) target = $region40
        $region39: #{tpu_custom_call.1} parent=31 // pred_region
          %s364 = ssub.s32 16, 16
          %365 = vsyncadd %s357, %s364
          %s366 = smul.addr %s20, 16
          %s367 = scalar_lea.hbm %s3, %s366
          %s369 = sshll.u32 %s359, 4
          %s370 = int_to_ptr.vmem [resolvable:$true] %s369
          %372 = dma.vmem_to_hbm [thread:$0]  %s370, 16, %s367, %s357
        $region40: #{tpu_custom_call.1} parent=31 // pred_fallthru
          _
      $region32: #{tpu_custom_call.1} parent=5 // pred_fallthru
        _
      %p373 = scmp.le.s32.totalorder 2, %s15
      // Predicated region
      $region41: #{tpu_custom_call.1} parent=5 // pred_check
        %p374 = pneg %p373
      $region42: #{tpu_custom_call.1} parent=5 // pred_check_branch
        %376 = sbr.rel (%p374) target = $region44
      $region43: #{tpu_custom_call.1} parent=5 // pred_region
        %s377 = ssub.s32 %s15, 2
        // Predicated region
        $region45: #{tpu_custom_call.1} parent=43 // pred_check
          %p378 = pneg %p122
        $region46: #{tpu_custom_call.1} parent=43 // pred_check_branch
          %380 = sbr.rel (%p378) target = $region48
        $region47: #{tpu_custom_call.1} parent=43 // pred_region
          %s381 = sand.u32 %s107, 1
          %s382 = scalar_lea.sflag [#allocation4], %s381
          %s383 = sand.u32 %s107, 1
          %s384 = scalar_lea.vmem [#allocation5], %s383
          %385 = dma.done %s382, 16
        $region48: #{tpu_custom_call.1} parent=43 // pred_fallthru
          _
      $region44: #{tpu_custom_call.1} parent=5 // pred_fallthru
        _
    $region6: #{tpu_custom_call.1} parent=1 // loop_footer
      %s19 = sadd.s32 1, %s15
    $region7: #{tpu_custom_call.1} parent=1 // loop_footer_branch
      %14 = sbr.rel target = $region3
    $region8: #{tpu_custom_call.1} parent=1 // loop_exit
      _
    %386 = vsyncpa [#allocation3], 1
    %s387 = scalar_lea.sflag [#allocation3], 1
    %388 = vsyncpa %s387, 1
    %389 = vsyncpa [#allocation4], 1
    %s390 = scalar_lea.sflag [#allocation4], 1
    %391 = vsyncpa %s390, 1

</llo_original>
